<compile_context>
chip_gen: v7x
topology: tpu7x:2x2x1
jax: 0.10.0
libtpu: 0.0.40
codegen_flags: <defaults>
</compile_context>

<pallas_src>
import functools

import jax
import jax.numpy as jnp
from jax.experimental import pallas as pl
from jax.experimental.pallas import tpu as pltpu

F32 = jnp.float32
BF16 = jnp.bfloat16
GN_EPS = 1e-5                   # torch_geometric GraphNorm eps
FC_PAD_ROWS = 8                 # pad the final (2, N) FC output rows to 8
VMEM_LIMIT = 32 * 1024 * 1024   # explicit scoped-VMEM budget (fits v5e/v6e/v7x)


def _round_up(x, m):
    return (x + m - 1) // m * m


def _choose_tiles(n):
    """(n_pad, tm, tk) for the dense A_hat^T aggregation.

    tm = output-column tile (lanes), tk = contraction tile.  Large N uses
    4 MiB bf16 A tiles (grid-overhead << DMA time); small N still gives the
    parallel axis extent >= 2 so both v7x TensorCores get work.
    """
    if n <= 1024:
        n_pad = _round_up(n, 256)
        return n_pad, max(128, n_pad // 2), n_pad
    n_pad = _round_up(n, 2048)
    return n_pad, 1024, 2048


def _norm_tile(n_pad):
    """Column tile for the cheap per-node kernels (encoder / GraphNorm)."""
    if n_pad <= 4096:
        return n_pad
    return 4096 if n_pad % 4096 == 0 else 2048


def _mosaic_params(semantics):
    return pltpu.CompilerParams(dimension_semantics=semantics,
                                vmem_limit_bytes=VMEM_LIMIT)


# ----------------------------------------------------------------------------
# Pallas kernels (all node tensors are in transposed (D, N) layout)
# ----------------------------------------------------------------------------
def _gcn_stats_kernel(xw_ref, at_ref, b_ref, m_ref, g_ref, p1_ref, p2_ref):
    """Fused GCNConv aggregation + per-graph moment reductions.

    g^T = (XW)^T @ A_hat^T + b, accumulated directly into the resident f32
    output block (out index_map ignores k).  At the last k step this column
    tile's contribution to the per-graph mean / E[x^2] is emitted (m holds
    1/count weights), so GraphNorm needs no extra pass over A_hat.
    """
    k = pl.program_id(1)

    @pl.when(k == 0)
    def _():
        g_ref[...] = jnp.broadcast_to(b_ref[...], g_ref.shape)   # init with bias

    g_ref[...] += jnp.dot(xw_ref[...], at_ref[...],
                          preferred_element_type=jnp.float32)

    @pl.when(k == pl.num_programs(1) - 1)
    def _():
        g = g_ref[...]
        m = m_ref[...]                                            # (tm, G) 1/count
        p1_ref[0] = jnp.dot(g, m, preferred_element_type=jnp.float32)
        p2_ref[0] = jnp.dot(g * g, m, preferred_element_type=jnp.float32)


def _graphnorm_kernel(*refs, add_residual, emit_xw, fuse_fc):
    """Fused GraphNorm + ReLU [+ residual add] [+ next-layer XW] [+ final FC]."""
    g_ref, st_ref, mean_ref, ex2_ref, alpha_ref, gamma_ref, beta_ref = refs[:7]
    pos = 7
    h_ref = None
    if add_residual:
        h_ref = refs[pos]
        pos += 1
    wnt_ref = None
    if emit_xw:
        wnt_ref = refs[pos]
        pos += 1
    if fuse_fc:
        wft_ref, bft_ref = refs[pos], refs[pos + 1]
        pos += 2
    o_ref = refs[pos]
    pos += 1
    xw_ref = refs[pos] if emit_xw else None

    g = g_ref[...]                                        # (dout, tn)
    st = st_ref[...]                                      # (G, tn) one-hot
    mean_n = jnp.dot(mean_ref[...], st, preferred_element_type=jnp.float32)
    ex2_n = jnp.dot(ex2_ref[...], st, preferred_element_type=jnp.float32)
    alpha = alpha_ref[...]                                # (dout, 1)
    cen = g - alpha * mean_n
    # TODO(synk): one-pass variance E[x^2] - (2a - a^2)*mean^2 in f32 can cancel
    # when |mean| >> std (PyG uses a two-pass centered moment).
    var_n = jnp.maximum(ex2_n - (2.0 * alpha - alpha * alpha) * mean_n * mean_n,
                        0.0)
    y = gamma_ref[...] * cen * jax.lax.rsqrt(var_n + GN_EPS) + beta_ref[...]
    y = jnp.maximum(y, 0.0)                               # ReLU
    if add_residual:
        y = h_ref[...] + y                                # h + ReLU(GN(GCN(h)))
    if fuse_fc:
        y = jnp.dot(wft_ref[...], y, preferred_element_type=jnp.float32) \
            + bft_ref[...]
    o_ref[...] = y.astype(o_ref.dtype)
    if emit_xw:                                           # next layer's (XW)^T
        xw_ref[...] = jnp.dot(wnt_ref[...], y,
                              preferred_element_type=jnp.float32
                              ).astype(xw_ref.dtype)


def _encoder_kernel(x_ref, w1t_ref, b1_ref, w2t_ref, b2_ref, wnt_ref,
                    h_ref, xw_ref):
    """Fused 2-layer MLP (Linear->ReLU->Linear) + first GCN layer's (XW)^T."""
    h = jnp.dot(w1t_ref[...], x_ref[...], preferred_element_type=jnp.float32)
    h = jnp.maximum(h + b1_ref[...], 0.0)
    y = jnp.dot(w2t_ref[...], h, preferred_element_type=jnp.float32) + b2_ref[...]
    h_ref[...] = y.astype(h_ref.dtype)
    xw_ref[...] = jnp.dot(wnt_ref[...], y,
                          preferred_element_type=jnp.float32).astype(xw_ref.dtype)


# ----------------------------------------------------------------------------
# pallas_call wrappers
# ----------------------------------------------------------------------------
def gcn_stats(xw_t, a_t, m, b_t, tm, tk):
    """g^T = (XW)^T @ A_hat^T + b, plus per-graph (mean, E[x^2])."""
    dout, n_pad = xw_t.shape
    g_pad = m.shape[1]
    n_i, n_k = n_pad // tm, n_pad // tk

    g, p1, p2 = pl.pallas_call(
        _gcn_stats_kernel,
        out_shape=(jax.ShapeDtypeStruct((dout, n_pad), F32),
                   jax.ShapeDtypeStruct((n_i, dout, g_pad), F32),
                   jax.ShapeDtypeStruct((n_i, dout, g_pad), F32)),
        grid_spec=pltpu.PrefetchScalarGridSpec(
            num_scalar_prefetch=0,
            grid=(n_i, n_k),
            in_specs=[
                pl.BlockSpec((dout, tk), lambda i, k: (0, k)),     # (XW)^T bf16
                pl.BlockSpec((tk, tm), lambda i, k: (k, i)),       # A_hat^T bf16
                pl.BlockSpec((dout, 1), lambda i, k: (0, 0)),      # bias (dout,1)
                pl.BlockSpec((tm, g_pad), lambda i, k: (i, 0)),    # M (1/count)
            ],
            out_specs=[
                pl.BlockSpec((dout, tm), lambda i, k: (0, i)),
                pl.BlockSpec((1, dout, g_pad), lambda i, k: (i, 0, 0)),
                pl.BlockSpec((1, dout, g_pad), lambda i, k: (i, 0, 0)),
            ],
        ),
        compiler_params=_mosaic_params(("parallel", "arbitrary")),
    )(xw_t, a_t, b_t, m)

    # tiny (n_i, dout, G) reductions; keeps the column axis "parallel".
    return g, p1.sum(axis=0), p2.sum(axis=0)


def graph_norm_apply(g_t, s_t, mean_g, ex2_g, gn, tn,
                     residual=None, next_w=None, fc_w=None, fc_b=None):
    """GraphNorm + ReLU [+ residual] and optionally the next layer's (XW)^T
    (bf16) or the fused final FC."""
    dout, n_pad = g_t.shape
    g_pad = s_t.shape[0]
    n_i = n_pad // tn
    add_residual = residual is not None
    emit_xw = next_w is not None
    fuse_fc = fc_w is not None
    d_o = fc_w.shape[0] if fuse_fc else dout

    in_specs = [
        pl.BlockSpec((dout, tn), lambda i: (0, i)),       # g^T
        pl.BlockSpec((g_pad, tn), lambda i: (0, i)),      # one-hot S^T
        pl.BlockSpec((dout, g_pad), lambda i: (0, 0)),    # mean per graph
        pl.BlockSpec((dout, g_pad), lambda i: (0, 0)),    # E[x^2] per graph
        pl.BlockSpec((dout, 1), lambda i: (0, 0)),        # alpha
        pl.BlockSpec((dout, 1), lambda i: (0, 0)),        # gamma
        pl.BlockSpec((dout, 1), lambda i: (0, 0)),        # beta
    ]
    args = [g_t, s_t, mean_g, ex2_g, gn["alpha"], gn["gamma"], gn["beta"]]
    if add_residual:
        in_specs.append(pl.BlockSpec((dout, tn), lambda i: (0, i)))
        args.append(residual)
    if emit_xw:
        dnext = next_w.shape[1]
        in_specs.append(pl.BlockSpec((dnext, dout), lambda i: (0, 0)))
        args.append(next_w.T)
    if fuse_fc:
        in_specs.append(pl.BlockSpec(fc_w.shape, lambda i: (0, 0)))
        in_specs.append(pl.BlockSpec((d_o, 1), lambda i: (0, 0)))
        args += [fc_w, fc_b]

    if emit_xw:
        out_shape = (jax.ShapeDtypeStruct((d_o, n_pad), F32),
                     jax.ShapeDtypeStruct((dnext, n_pad), BF16))
        out_specs = [pl.BlockSpec((d_o, tn), lambda i: (0, i)),
                     pl.BlockSpec((dnext, tn), lambda i: (0, i))]
    else:
        out_shape = jax.ShapeDtypeStruct((d_o, n_pad), F32)
        out_specs = pl.BlockSpec((d_o, tn), lambda i: (0, i))

    kern = functools.partial(_graphnorm_kernel, add_residual=add_residual,
                             emit_xw=emit_xw, fuse_fc=fuse_fc)
    res = pl.pallas_call(
        kern,
        out_shape=out_shape,
        grid_spec=pltpu.PrefetchScalarGridSpec(
            num_scalar_prefetch=0,
            grid=(n_i,),
            in_specs=in_specs,
            out_specs=out_specs,
        ),
        compiler_params=_mosaic_params(("parallel",)),
    )(*args)
    if emit_xw:
        return res[0], res[1]
    return res


def encoder_mlp(x_t, p1, p2, next_w, tn):
    """Fused point encoder (Linear->ReLU->Linear) + first layer's (XW)^T."""
    din, n_pad = x_t.shape
    dh = p1["w"].shape[1]
    de = p2["w"].shape[1]
    dn = next_w.shape[1]
    n_i = n_pad // tn
    h, xw = pl.pallas_call(
        _encoder_kernel,
        out_shape=(jax.ShapeDtypeStruct((de, n_pad), F32),
                   jax.ShapeDtypeStruct((dn, n_pad), BF16)),
        grid_spec=pltpu.PrefetchScalarGridSpec(
            num_scalar_prefetch=0,
            grid=(n_i,),
            in_specs=[
                pl.BlockSpec((din, tn), lambda i: (0, i)),
                pl.BlockSpec((dh, din), lambda i: (0, 0)),
                pl.BlockSpec((dh, 1), lambda i: (0, 0)),
                pl.BlockSpec((de, dh), lambda i: (0, 0)),
                pl.BlockSpec((de, 1), lambda i: (0, 0)),
                pl.BlockSpec((dn, de), lambda i: (0, 0)),
            ],
            out_specs=[pl.BlockSpec((de, tn), lambda i: (0, i)),
                       pl.BlockSpec((dn, tn), lambda i: (0, i))],
        ),
        compiler_params=_mosaic_params(("parallel",)),
    )(x_t, p1["w"].T, p1["b"].T, p2["w"].T, p2["b"].T, next_w.T)
    return h, xw


# ----------------------------------------------------------------------------
# Plain-JAX glue: graph structure -> operators (no dense N x N pooling matrix)
# ----------------------------------------------------------------------------
def build_graph_operators(index, batch, num_nodes, n_pad, num_graphs, g_pad):
    """Returns (A_hat^T bf16 (n_pad,n_pad), S^T (g_pad,n_pad), M (n_pad,g_pad))."""
    self_loops = jnp.arange(num_nodes, dtype=index.dtype)
    src = jnp.concatenate([index[0], self_loops])
    dst = jnp.concatenate([index[1], self_loops])
    deg = jnp.zeros((num_nodes,), F32).at[dst].add(1.0)
    dinv = jnp.where(deg > 0, deg ** -0.5, 0.0)
    w = dinv[dst] * dinv[src]
    # Scatter straight into the padded buffer with swapped indices: this IS
    # A_hat^T, no jnp.pad copy, single bf16 cast.
    a_t = jnp.zeros((n_pad, n_pad), F32).at[src, dst].add(w).astype(BF16)

    # padded nodes go to a dedicated graph slot -> never contaminate real stats
    pad_ids = jnp.full((n_pad - num_nodes,), num_graphs, batch.dtype)
    batch_pad = jnp.concatenate([batch, pad_ids])
    onehot = (batch_pad[:, None] == jnp.arange(g_pad)[None, :]).astype(F32)
    counts = jnp.maximum(onehot.sum(axis=0), 1.0)        # guard empty graph slots
    m = onehot / counts[None, :]                         # (n_pad, g_pad)
    s_t = onehot.T                                       # (g_pad, n_pad)
    return a_t, s_t, m


# ----------------------------------------------------------------------------
# Parameter construction (deterministic, synthetic)
# ----------------------------------------------------------------------------
def init_linear(key, din, dout):
    kw, kb = jax.random.split(key)
    bound = 1.0 / jnp.sqrt(jnp.asarray(din, F32))
    w = jax.random.uniform(kw, (din, dout), F32, -bound, bound)
    b = jax.random.uniform(kb, (1, dout), F32, -bound, bound)
    return {"w": w, "b": b}


def init_graphnorm(d):
    return {"alpha": jnp.ones((d, 1), F32),   # mean_scale
            "gamma": jnp.ones((d, 1), F32),   # weight
            "beta": jnp.zeros((d, 1), F32)}   # bias


def init_params(key, p_i, p_h, p_e, o_edge_dim, edge_dim,
                num_layers, v_h1_s, v_h2_s):
    keys = jax.random.split(key, 8 + 2 * num_layers)
    return {
        "edges_encoder": init_linear(keys[0], o_edge_dim, edge_dim),
        # TODO(synk): Encoder(p_i, p_h, p_e) definition not provided in the
        # reference; implemented as Linear(p_i,p_h) -> ReLU -> Linear(p_h,p_e).
        "enc_fc1": init_linear(keys[1], p_i, p_h),
        "enc_fc2": init_linear(keys[2], p_h, p_e),
        # TODO(synk): EPResGCN(p_e, edge_dim, num_layers) definition not
        # provided; implemented as residual blocks h = h + ReLU(GraphNorm(GCNConv(h))).
        "res_layers": [
            {"gcn": init_linear(keys[3 + 2 * l], p_e, p_e),
             "gn": init_graphnorm(p_e)}
            for l in range(num_layers)
        ],
        "dec_gcn1": init_linear(keys[3 + 2 * num_layers], p_e, v_h1_s),
        "dec_gn1": init_graphnorm(v_h1_s),
        "dec_gcn2": init_linear(keys[4 + 2 * num_layers], v_h1_s, v_h2_s),
        "dec_gn2": init_graphnorm(v_h2_s),
        "dec_fc1": init_linear(keys[5 + 2 * num_layers], v_h2_s, 2),
    }


# ----------------------------------------------------------------------------
# DnnCfD forward
# ----------------------------------------------------------------------------
def dnn_cfd_forward(params, point, condition, index, attr, batch, time,
                    num_graphs):
    n = point.shape[0]
    n_pad, tm, tk = _choose_tiles(n)
    tn = _norm_tile(n_pad)
    g_pad = _round_up(num_graphs + 1, 8)     # +1 slot for padded nodes
    a_t, s_t, m = build_graph_operators(index, batch, n, n_pad,
                                        num_graphs, g_pad)

    # attr = self.edges_encoder(attr)
    # TODO(synk): EPResGCN edge-attr consumption unspecified; result is unused
    # downstream, so keep it as a single cheap XLA matmul (no extra kernel).
    _attr_e = attr @ params["edges_encoder"]["w"] + params["edges_encoder"]["b"]

    # point = torch.cat((point, condition, time), dim=1)  -> transposed layout
    x = jnp.concatenate([point, condition, time], axis=1)
    x_t = jnp.pad(x.T, ((0, 0), (0, n_pad - n)))

    # point = self.point_encoder(point, batch)   (+ first layer's XW^T, fused)
    layers = params["res_layers"]
    first_w = layers[0]["gcn"]["w"] if layers else params["dec_gcn1"]["w"]
    h_t, xw_t = encoder_mlp(x_t, params["enc_fc1"], params["enc_fc2"],
                            first_w, tn)

    # trans_encoder = self.transformer_encoder(point, index, attr, batch)
    for l, layer in enumerate(layers):
        g_t, mean_g, ex2_g = gcn_stats(xw_t, a_t, m, layer["gcn"]["b"].T, tm, tk)
        next_w = (layers[l + 1]["gcn"]["w"] if l + 1 < len(layers)
                  else params["dec_gcn1"]["w"])
        h_t, xw_t = graph_norm_apply(g_t, s_t, mean_g, ex2_g, layer["gn"], tn,
                                     residual=h_t, next_w=next_w)

    # out = self.decoder(trans_encoder, index, batch)
    g_t, mean_g, ex2_g = gcn_stats(xw_t, a_t, m, params["dec_gcn1"]["b"].T,
                                   tm, tk)
    _, xw_t = graph_norm_apply(g_t, s_t, mean_g, ex2_g, params["dec_gn1"], tn,
                               next_w=params["dec_gcn2"]["w"])

    g_t, mean_g, ex2_g = gcn_stats(xw_t, a_t, m, params["dec_gcn2"]["b"].T,
                                   tm, tk)
    # fuse GN2 + ReLU + final FC; FC rows padded to 8 sublanes, sliced outside
    wf_t = jnp.pad(params["dec_fc1"]["w"].T, ((0, FC_PAD_ROWS - 2), (0, 0)))
    bf_t = jnp.pad(params["dec_fc1"]["b"].T, ((0, FC_PAD_ROWS - 2), (0, 0)))
    out_t = graph_norm_apply(g_t, s_t, mean_g, ex2_g, params["dec_gn2"], tn,
                             fc_w=wf_t, fc_b=bf_t)
    return out_t[:2, :n].T


# ----------------------------------------------------------------------------
# Demo
# ----------------------------------------------------------------------------
if __name__ == "__main__":
    # Hyper-params (args)
    POINT_DIM, COND_DIM, TIME_DIM = 4, 3, 1
    P_I = POINT_DIM + COND_DIM + TIME_DIM      # 8
    P_H, P_E = 16, 32
    O_EDGE_DIM, EDGE_DIM = 4, 8
    NUM_LAYERS = 2
    V_H1_S, V_H2_S = 16, 16

    N_NODES, N_GRAPHS = 16, 2
    NODES_PER_GRAPH = N_NODES // N_GRAPHS
    N_EDGES = 32

    key = jax.random.PRNGKey(0)
    k_par, k_pt, k_cond, k_attr, k_time, k_e0, k_e1 = jax.random.split(key, 7)

    params = init_params(k_par, P_I, P_H, P_E, O_EDGE_DIM, EDGE_DIM,
                         NUM_LAYERS, V_H1_S, V_H2_S)

    point = jax.random.normal(k_pt, (N_NODES, POINT_DIM), F32)
    condition = jax.random.normal(k_cond, (N_NODES, COND_DIM), F32)
    time = jax.random.normal(k_time, (N_NODES, TIME_DIM), F32)
    attr = jax.random.normal(k_attr, (N_EDGES, O_EDGE_DIM), F32)

    # intra-graph random edges: 16 edges in graph 0, 16 in graph 1
    e0 = jax.random.randint(k_e0, (2, N_EDGES // 2), 0, NODES_PER_GRAPH)
    e1 = jax.random.randint(k_e1, (2, N_EDGES // 2), 0, NODES_PER_GRAPH) \
        + NODES_PER_GRAPH
    index = jnp.concatenate([e0, e1], axis=1).astype(jnp.int32)   # (2, E)

    batch = jnp.repeat(jnp.arange(N_GRAPHS, dtype=jnp.int32), NODES_PER_GRAPH)

    out = dnn_cfd_forward(params, point, condition, index, attr, batch, time,
                          N_GRAPHS)
    out = jax.block_until_ready(out)
    assert out.shape == (N_NODES, 2) and out.dtype == F32
    assert bool(jnp.all(jnp.isfinite(out)))
    print("KERNEL_OK")
</pallas_src>

<mosaic_0001>
module attributes {stable_mosaic.version = 11 : i64} {
  func.func @_encoder_kernel(%arg0: i32, %arg1: memref<8x256xf32, #tpu.memory_space<vmem>>, %arg2: memref<16x8xf32, #tpu.memory_space<vmem>>, %arg3: memref<16x1xf32, #tpu.memory_space<vmem>>, %arg4: memref<32x16xf32, #tpu.memory_space<vmem>>, %arg5: memref<32x1xf32, #tpu.memory_space<vmem>>, %arg6: memref<32x32xf32, #tpu.memory_space<vmem>>, %arg7: memref<32x256xf32, #tpu.memory_space<vmem>>, %arg8: memref<32x256xbf16, #tpu.memory_space<vmem>>) attributes {dimension_semantics = [#tpu.dimension_semantics<parallel>], iteration_bounds = array<i64: 1>, scalar_prefetch = 0 : i64, scratch_operands = 0 : i64, tpu.core_type = #tpu.core_type<tc>, window_params = [{transform_indices = @transform_0, window_bounds = array<i64: 8, 256>}, {pipeline_mode = #tpu.pipeline_mode<synchronous>, transform_indices = @transform_1, window_bounds = array<i64: 16, 8>}, {pipeline_mode = #tpu.pipeline_mode<synchronous>, transform_indices = @transform_2, window_bounds = array<i64: 16, 1>}, {pipeline_mode = #tpu.pipeline_mode<synchronous>, transform_indices = @transform_3, window_bounds = array<i64: 32, 16>}, {pipeline_mode = #tpu.pipeline_mode<synchronous>, transform_indices = @transform_4, window_bounds = array<i64: 32, 1>}, {pipeline_mode = #tpu.pipeline_mode<synchronous>, transform_indices = @transform_5, window_bounds = array<i64: 32, 32>}, {transform_indices = @transform_6, window_bounds = array<i64: 32, 256>}, {transform_indices = @transform_7, window_bounds = array<i64: 32, 256>}]} {
    %c0 = arith.constant 0 : index
    %c0_0 = arith.constant 0 : index
    %0 = vector.load %arg2[%c0, %c0_0] : memref<16x8xf32, #tpu.memory_space<vmem>>, vector<16x8xf32>
    %c0_1 = arith.constant 0 : index
    %c0_2 = arith.constant 0 : index
    %1 = vector.load %arg1[%c0_1, %c0_2] : memref<8x256xf32, #tpu.memory_space<vmem>>, vector<8x256xf32>
    %cst = arith.constant dense<0.000000e+00> : vector<16x256xf32>
    %2 = tpu.matmul %0, %1, %cst {dimension_numbers = #tpu.dot_dimension_numbers<[1], [0], [0], [1], [0, 0, 1, 1], [], []>} : vector<16x8xf32>, vector<8x256xf32>, vector<16x256xf32> -> vector<16x256xf32>
    %c0_3 = arith.constant 0 : index
    %c0_4 = arith.constant 0 : index
    %3 = vector.load %arg3[%c0_3, %c0_4] : memref<16x1xf32, #tpu.memory_space<vmem>>, vector<16x1xf32>
    %4 = vector.broadcast %3 : vector<16x1xf32> to vector<16x256xf32>
    %5 = arith.addf %2, %4 : vector<16x256xf32>
    %cst_5 = arith.constant 0.000000e+00 : f32
    %6 = vector.broadcast %cst_5 : f32 to vector<16x256xf32>
    %7 = arith.maximumf %5, %6 : vector<16x256xf32>
    %c0_6 = arith.constant 0 : index
    %c0_7 = arith.constant 0 : index
    %8 = vector.load %arg4[%c0_6, %c0_7] : memref<32x16xf32, #tpu.memory_space<vmem>>, vector<32x16xf32>
    %cst_8 = arith.constant dense<0.000000e+00> : vector<32x256xf32>
    %9 = tpu.matmul %8, %7, %cst_8 {dimension_numbers = #tpu.dot_dimension_numbers<[1], [0], [0], [1], [0, 0, 1, 1], [], []>} : vector<32x16xf32>, vector<16x256xf32>, vector<32x256xf32> -> vector<32x256xf32>
    %c0_9 = arith.constant 0 : index
    %c0_10 = arith.constant 0 : index
    %10 = vector.load %arg5[%c0_9, %c0_10] : memref<32x1xf32, #tpu.memory_space<vmem>>, vector<32x1xf32>
    %11 = vector.broadcast %10 : vector<32x1xf32> to vector<32x256xf32>
    %12 = arith.addf %9, %11 : vector<32x256xf32>
    %c0_11 = arith.constant 0 : index
    %c0_12 = arith.constant 0 : index
    %13 = vector.load %arg7[%c0_11, %c0_12] : memref<32x256xf32, #tpu.memory_space<vmem>>, vector<32x256xf32>
    tpu.vector_store %arg7[%c0_11, %c0_12], %12 {strides = array<i32>} : memref<32x256xf32, #tpu.memory_space<vmem>>, vector<32x256xf32>,
    %c0_13 = arith.constant 0 : index
    %c0_14 = arith.constant 0 : index
    %14 = vector.load %arg6[%c0_13, %c0_14] : memref<32x32xf32, #tpu.memory_space<vmem>>, vector<32x32xf32>
    %cst_15 = arith.constant dense<0.000000e+00> : vector<32x256xf32>
    %15 = tpu.matmul %14, %12, %cst_15 {dimension_numbers = #tpu.dot_dimension_numbers<[1], [0], [0], [1], [0, 0, 1, 1], [], []>} : vector<32x32xf32>, vector<32x256xf32>, vector<32x256xf32> -> vector<32x256xf32>
    %16 = arith.truncf %15 : vector<32x256xf32> to vector<32x256xbf16>
    %c0_16 = arith.constant 0 : index
    %c0_17 = arith.constant 0 : index
    %17 = vector.load %arg8[%c0_16, %c0_17] : memref<32x256xbf16, #tpu.memory_space<vmem>>, vector<32x256xbf16>
    tpu.vector_store %arg8[%c0_16, %c0_17], %16 {strides = array<i32>} : memref<32x256xbf16, #tpu.memory_space<vmem>>, vector<32x256xbf16>,
    return
  }
  func.func @transform_0(%arg0: i32) -> (i32, i32) {
    %c0_i32 = arith.constant 0 : i32
    %c0_i32_0 = arith.constant 0 : i32
    return %c0_i32, %arg0 : i32, i32
  }
  func.func @transform_1(%arg0: i32) -> (i32, i32) {
    %c0_i32 = arith.constant 0 : i32
    %c0_i32_0 = arith.constant 0 : i32
    %c0_i32_1 = arith.constant 0 : i32
    return %c0_i32, %c0_i32_0 : i32, i32
  }
  func.func @transform_2(%arg0: i32) -> (i32, i32) {
    %c0_i32 = arith.constant 0 : i32
    %c0_i32_0 = arith.constant 0 : i32
    %c0_i32_1 = arith.constant 0 : i32
    return %c0_i32, %c0_i32_0 : i32, i32
  }
  func.func @transform_3(%arg0: i32) -> (i32, i32) {
    %c0_i32 = arith.constant 0 : i32
    %c0_i32_0 = arith.constant 0 : i32
    %c0_i32_1 = arith.constant 0 : i32
    return %c0_i32, %c0_i32_0 : i32, i32
  }
  func.func @transform_4(%arg0: i32) -> (i32, i32) {
    %c0_i32 = arith.constant 0 : i32
    %c0_i32_0 = arith.constant 0 : i32
    %c0_i32_1 = arith.constant 0 : i32
    return %c0_i32, %c0_i32_0 : i32, i32
  }
  func.func @transform_5(%arg0: i32) -> (i32, i32) {
    %c0_i32 = arith.constant 0 : i32
    %c0_i32_0 = arith.constant 0 : i32
    %c0_i32_1 = arith.constant 0 : i32
    return %c0_i32, %c0_i32_0 : i32, i32
  }
  func.func @transform_6(%arg0: i32) -> (i32, i32) {
    %c0_i32 = arith.constant 0 : i32
    %c0_i32_0 = arith.constant 0 : i32
    return %c0_i32, %arg0 : i32, i32
  }
  func.func @transform_7(%arg0: i32) -> (i32, i32) {
    %c0_i32 = arith.constant 0 : i32
    %c0_i32_0 = arith.constant 0 : i32
    return %c0_i32, %arg0 : i32, i32
  }
}

</mosaic_0001>

<llo_original>
// kernel: tpu_custom_call.1
$region0: #{tpu_custom_call.1}
  #allocation0 [shape = 'u32[]', space=smem, size = 0x4, offset = 0x4, fixed_abs, tag = 'smem constant byte address 0x4 - core index']
  #allocation1 [shape = 'u32[144,128]{1,0:T(1,128)}', space=vmem, size = 0x12000, scoped, tag = 'internal scratch']
  %s0 = inlined_call_operand.vmem [shape: f32[8,256], index: 0, kind: input, shape index: {}]
  %s1 = inlined_call_operand.vmem [shape: f32[16,8], index: 1, kind: input, shape index: {}]
  %s2 = inlined_call_operand.vmem [shape: f32[16,1], index: 2, kind: input, shape index: {}]
  %s3 = inlined_call_operand.vmem [shape: f32[32,16], index: 3, kind: input, shape index: {}]
  %s4 = inlined_call_operand.vmem [shape: f32[32,1], index: 4, kind: input, shape index: {}]
  %s5 = inlined_call_operand.vmem [shape: f32[32,32], index: 5, kind: input, shape index: {}]
  %s6 = inlined_call_operand.hbm [shape: f32[32,256], index: 6, kind: output, shape index: {0}]
  %s7 = inlined_call_operand.hbm [shape: bf16[32,256], index: 7, kind: output, shape index: {1}]
  %8 = xla_tuple %s6, %s7
  %s9 = sld [smem:[#allocation0]]
  $region42: #{tpu_custom_call.1} parent=0
    _
  %s11 = ssub.s32 1, %s9
  %s12 = scalar_select 0, %s11, %s9
  $region1: #{tpu_custom_call.1} parent=0
    #allocation2 [shape = 'u8[32768]{0}', space=vmem, size = 0x8000, scoped, tag = 'output window, operand 0, single buffered']
    #allocation3 [shape = 's32[1]{0}', space=sflag, size = 0x4, scoped, tag = 'scoped memory for tpu_custom_call.1']
    #allocation4 [shape = 'u8[16384]{0}', space=vmem, size = 0x4000, scoped, tag = 'output window, operand 1, single buffered']
    #allocation5 [shape = 's32[1]{0}', space=sflag, size = 0x4, scoped, tag = 'scoped memory for tpu_custom_call.1']
    %13 = vsyncpa [#allocation3], 0
    %14 = vsyncpa [#allocation5], 0
    // Predicated region
    $region2: #{tpu_custom_call.1} parent=1 // pred_check
      _
    $region3: #{tpu_custom_call.1} parent=1 // pred_check_branch
      %16 = sbr.rel (0) target = $region5
    $region4: #{tpu_custom_call.1} parent=1 // pred_region
      _
    $region5: #{tpu_custom_call.1} parent=1 // pred_fallthru
      _
    // Predicated region
    $region6: #{tpu_custom_call.1} parent=1 // pred_check
      _
    $region7: #{tpu_custom_call.1} parent=1 // pred_check_branch
      %18 = sbr.rel (0) target = $region9
    $region8: #{tpu_custom_call.1} parent=1 // pred_region
      _
    $region9: #{tpu_custom_call.1} parent=1 // pred_fallthru
      _
    // Predicated region
    $region10: #{tpu_custom_call.1} parent=1 // pred_check
      _
    $region11: #{tpu_custom_call.1} parent=1 // pred_check_branch
      %20 = sbr.rel (0) target = $region13
    $region12: #{tpu_custom_call.1} parent=1 // pred_region
      _
    $region13: #{tpu_custom_call.1} parent=1 // pred_fallthru
      _
    // Predicated region
    $region14: #{tpu_custom_call.1} parent=1 // pred_check
      _
    $region15: #{tpu_custom_call.1} parent=1 // pred_check_branch
      %22 = sbr.rel (0) target = $region17
    $region16: #{tpu_custom_call.1} parent=1 // pred_region
      _
    $region17: #{tpu_custom_call.1} parent=1 // pred_fallthru
      _
    // Predicated region
    $region18: #{tpu_custom_call.1} parent=1 // pred_check
      _
    $region19: #{tpu_custom_call.1} parent=1 // pred_check_branch
      %24 = sbr.rel (0) target = $region21
    $region20: #{tpu_custom_call.1} parent=1 // pred_region
      _
    $region21: #{tpu_custom_call.1} parent=1 // pred_fallthru
      _
    // Predicated region
    $region22: #{tpu_custom_call.1} parent=1 // pred_check
      _
    $region23: #{tpu_custom_call.1} parent=1 // pred_check_branch
      %26 = sbr.rel (0) target = $region25
    $region24: #{tpu_custom_call.1} parent=1 // pred_region
      _
    $region25: #{tpu_custom_call.1} parent=1 // pred_fallthru
      _
    %v27 = vld [vmem:[%s1] sm:$0xff]
    %v28 = vld [vmem:[%s1 + $0x8] sm:$0xff]
    %v29 = vld [vmem:[%s0] sm:$0xff]
    %v30 = vld [vmem:[%s0 + $0x8] sm:$0xff]
    %v31 = vld [vmem:[%s2] sm:$0xff]
    %v32 = vld [vmem:[%s2 + $0x8] sm:$0xff]
    %34 = vset.pattern.permute.xlu0 0
    %35 = vperm.xlu0 %34, %v31
    %v36 = vpop.permute.xlu0 %35
    %39 = vset.pattern.permute.xlu0 0
    %40 = vperm.xlu0 %39, %v32
    %v41 = vpop.permute.xlu0 %40
    %vm43 = vcmask 64512
    %v45 = vsel %vm43, %v27, 0
    %v48 = vsel %vm43, %v28, 0
    %50 = vmatprep.subr.mxu0 %v30
    %51 = vmatpush1.msra.mxu0 %v29
    %52 = vmatprep.subr.mxu0 0.0
    %53 = vmatpush1.msra.mxu0 0.0
    %54 = vmatprep.subr.mxu0 0.0
    %55 = vmatpush1.msra.mxu0 0.0
    %56 = vmatprep.subr.mxu0 0.0
    %57 = vmatpush1.msra.mxu0 0.0
    %58 = vmatprep.subr.mxu0 0.0
    %59 = vmatpush1.msra.mxu0 0.0
    %60 = vmatprep.subr.mxu0 0.0
    %61 = vmatpush1.msra.mxu0 0.0
    %62 = vmatprep.subr.mxu0 0.0
    %63 = vmatpush1.msra.mxu0 0.0
    %64 = vmatprep.subr.mxu0 0.0
    %65 = vmatpush1.msra.mxu0 0.0
    %66 = vmatprep.subr.mxu0 0.0
    %67 = vmatpush1.msra.mxu0 0.0
    %68 = vmatprep.subr.mxu0 0.0
    %69 = vmatpush1.msra.mxu0 0.0
    %70 = vmatprep.subr.mxu0 0.0
    %71 = vmatpush1.msra.mxu0 0.0
    %72 = vmatprep.subr.mxu0 0.0
    %73 = vmatpush1.msra.mxu0 0.0
    %74 = vmatprep.subr.mxu0 0.0
    %75 = vmatpush1.msra.mxu0 0.0
    %76 = vmatprep.subr.mxu0 0.0
    %77 = vmatpush1.msra.mxu0 0.0
    %78 = vmatprep.subr.mxu0 0.0
    %79 = vmatpush1.msra.mxu0 0.0
    %80 = vmatprep.subr.mxu0 0.0
    %81 = vmatpush1.msra.mxu0 0.0
    %82 = vmatprep.subr.mxu0 0.0
    %83 = vmatpush1.msra.mxu0 0.0
    %84 = vmatprep.subr.mxu0 0.0
    %85 = vmatpush1.msra.mxu0 0.0
    %86 = vmatprep.subr.mxu0 0.0
    %87 = vmatpush1.msra.mxu0 0.0
    %88 = vmatprep.subr.mxu0 0.0
    %89 = vmatpush1.msra.mxu0 0.0
    %90 = vmatprep.subr.mxu0 0.0
    %91 = vmatpush1.msra.mxu0 0.0
    %92 = vmatprep.subr.mxu0 0.0
    %93 = vmatpush1.msra.mxu0 0.0
    %94 = vmatprep.subr.mxu0 0.0
    %95 = vmatpush1.msra.mxu0 0.0
    %96 = vmatprep.subr.mxu0 0.0
    %97 = vmatpush1.msra.mxu0 0.0
    %98 = vmatprep.subr.mxu0 0.0
    %99 = vmatpush1.msra.mxu0 0.0
    %100 = vmatprep.subr.mxu0 0.0
    %101 = vmatpush1.msra.mxu0 0.0
    %102 = vmatprep.subr.mxu0 0.0
    %103 = vmatpush1.msra.mxu0 0.0
    %104 = vmatprep.subr.mxu0 0.0
    %105 = vmatpush1.msra.mxu0 0.0
    %106 = vmatprep.subr.mxu0 0.0
    %107 = vmatpush1.msra.mxu0 0.0
    %108 = vmatprep.subr.mxu0 0.0
    %109 = vmatpush1.msra.mxu0 0.0
    %110 = vmatprep.subr.mxu0 0.0
    %111 = vmatpush1.msra.mxu0 0.0
    %112 = vmatprep.subr.mxu0 0.0
    %113 = vmatpush1.msra.mxu0 0.0
    %114 = vmatprep.mubr.f32.mxu0 0.0
    %115 = vmatmul.mubr.f32.gmra.mrb[0].mxu0 %v45
    %v116 = vpop.f32.mrb[0].mxu0
    %v117 = vadd.f32 %v36, %v116
    %v118 = vpop.f32.mrb[0].mxu0
    %v119 = vadd.f32 %v36, %v118
    %120 = vmatprep.mubr.f32.mxu0 0.0
    %121 = vmatmul.mubr.f32.gmra.mrb[0].mxu0 %v48
    %v122 = vpop.f32.mrb[0].mxu0
    %v123 = vadd.f32 %v41, %v122
    %v124 = vpop.f32.mrb[0].mxu0
    %v125 = vadd.f32 %v41, %v124
    %126 = vdwg.mxu0
    %v127 = vmax.f32 %v117, 0.0
    %v128 = vmax.f32 %v119, 0.0
    %v129 = vmax.f32 %v123, 0.0
    %v130 = vmax.f32 %v125, 0.0
    %v131 = vld [vmem:[%s3] sm:$0xff]
    %v132 = vld [vmem:[%s3 + $0x8] sm:$0xff]
    %v133 = vld [vmem:[%s3 + $0x10] sm:$0xff]
    %v134 = vld [vmem:[%s3 + $0x18] sm:$0xff]
    %v135 = vld [vmem:[%s4] sm:$0xff]
    %v136 = vld [vmem:[%s4 + $0x8] sm:$0xff]
    %v137 = vld [vmem:[%s4 + $0x10] sm:$0xff]
    %v138 = vld [vmem:[%s4 + $0x18] sm:$0xff]
    %140 = vset.pattern.permute.xlu0 0
    %141 = vperm.xlu0 %140, %v135
    %v142 = vpop.permute.xlu0 %141
    %145 = vset.pattern.permute.xlu0 0
    %146 = vperm.xlu0 %145, %v136
    %v147 = vpop.permute.xlu0 %146
    %150 = vset.pattern.permute.xlu0 0
    %151 = vperm.xlu0 %150, %v137
    %v152 = vpop.permute.xlu0 %151
    %155 = vset.pattern.permute.xlu0 0
    %156 = vperm.xlu0 %155, %v138
    %v157 = vpop.permute.xlu0 %156
    %vm159 = vcmask 130048
    %v161 = vsel %vm159, %v131, 0
    %v164 = vsel %vm159, %v132, 0
    %v167 = vsel %vm159, %v133, 0
    %v170 = vsel %vm159, %v134, 0
    %172 = vmatprep.subr.mxu0 %v128
    %173 = vmatpush1.msra.mxu0 %v127
    %174 = vmatprep.subr.mxu0 %v130
    %175 = vmatpush1.msra.mxu0 %v129
    %176 = vmatprep.subr.mxu0 0.0
    %177 = vmatpush1.msra.mxu0 0.0
    %178 = vmatprep.subr.mxu0 0.0
    %179 = vmatpush1.msra.mxu0 0.0
    %180 = vmatprep.subr.mxu0 0.0
    %181 = vmatpush1.msra.mxu0 0.0
    %182 = vmatprep.subr.mxu0 0.0
    %183 = vmatpush1.msra.mxu0 0.0
    %184 = vmatprep.subr.mxu0 0.0
    %185 = vmatpush1.msra.mxu0 0.0
    %186 = vmatprep.subr.mxu0 0.0
    %187 = vmatpush1.msra.mxu0 0.0
    %188 = vmatprep.subr.mxu0 0.0
    %189 = vmatpush1.msra.mxu0 0.0
    %190 = vmatprep.subr.mxu0 0.0
    %191 = vmatpush1.msra.mxu0 0.0
    %192 = vmatprep.subr.mxu0 0.0
    %193 = vmatpush1.msra.mxu0 0.0
    %194 = vmatprep.subr.mxu0 0.0
    %195 = vmatpush1.msra.mxu0 0.0
    %196 = vmatprep.subr.mxu0 0.0
    %197 = vmatpush1.msra.mxu0 0.0
    %198 = vmatprep.subr.mxu0 0.0
    %199 = vmatpush1.msra.mxu0 0.0
    %200 = vmatprep.subr.mxu0 0.0
    %201 = vmatpush1.msra.mxu0 0.0
    %202 = vmatprep.subr.mxu0 0.0
    %203 = vmatpush1.msra.mxu0 0.0
    %204 = vmatprep.subr.mxu0 0.0
    %205 = vmatpush1.msra.mxu0 0.0
    %206 = vmatprep.subr.mxu0 0.0
    %207 = vmatpush1.msra.mxu0 0.0
    %208 = vmatprep.subr.mxu0 0.0
    %209 = vmatpush1.msra.mxu0 0.0
    %210 = vmatprep.subr.mxu0 0.0
    %211 = vmatpush1.msra.mxu0 0.0
    %212 = vmatprep.subr.mxu0 0.0
    %213 = vmatpush1.msra.mxu0 0.0
    %214 = vmatprep.subr.mxu0 0.0
    %215 = vmatpush1.msra.mxu0 0.0
    %216 = vmatprep.subr.mxu0 0.0
    %217 = vmatpush1.msra.mxu0 0.0
    %218 = vmatprep.subr.mxu0 0.0
    %219 = vmatpush1.msra.mxu0 0.0
    %220 = vmatprep.subr.mxu0 0.0
    %221 = vmatpush1.msra.mxu0 0.0
    %222 = vmatprep.subr.mxu0 0.0
    %223 = vmatpush1.msra.mxu0 0.0
    %224 = vmatprep.subr.mxu0 0.0
    %225 = vmatpush1.msra.mxu0 0.0
    %226 = vmatprep.subr.mxu0 0.0
    %227 = vmatpush1.msra.mxu0 0.0
    %228 = vmatprep.subr.mxu0 0.0
    %229 = vmatpush1.msra.mxu0 0.0
    %230 = vmatprep.subr.mxu0 0.0
    %231 = vmatpush1.msra.mxu0 0.0
    %232 = vmatprep.subr.mxu0 0.0
    %233 = vmatpush1.msra.mxu0 0.0
    %234 = vmatprep.subr.mxu0 0.0
    %235 = vmatpush1.msra.mxu0 0.0
    %236 = vmatprep.mubr.f32.mxu0 0.0
    %237 = vmatmul.mubr.f32.gmra.mrb[0].mxu0 %v161
    %v238 = vpop.f32.mrb[0].mxu0
    %v239 = vadd.f32 %v142, %v238
    %v240 = vpop.f32.mrb[0].mxu0
    %v241 = vadd.f32 %v142, %v240
    %242 = vmatprep.mubr.f32.mxu0 0.0
    %243 = vmatmul.mubr.f32.gmra.mrb[0].mxu0 %v164
    %v244 = vpop.f32.mrb[0].mxu0
    %v245 = vadd.f32 %v147, %v244
    %v246 = vpop.f32.mrb[0].mxu0
    %v247 = vadd.f32 %v147, %v246
    %248 = vmatprep.mubr.f32.mxu0 0.0
    %249 = vmatmul.mubr.f32.gmra.mrb[0].mxu0 %v167
    %v250 = vpop.f32.mrb[0].mxu0
    %v251 = vadd.f32 %v152, %v250
    %v252 = vpop.f32.mrb[0].mxu0
    %v253 = vadd.f32 %v152, %v252
    %254 = vmatprep.mubr.f32.mxu0 0.0
    %255 = vmatmul.mubr.f32.gmra.mrb[0].mxu0 %v170
    %v256 = vpop.f32.mrb[0].mxu0
    %v257 = vadd.f32 %v157, %v256
    %v258 = vpop.f32.mrb[0].mxu0
    %v259 = vadd.f32 %v157, %v258
    %260 = vdwg.mxu0
    %261 = vst [vmem:[#allocation2] sm:$0xff] %v239
    %262 = vst [vmem:[#allocation2 + $0x8] sm:$0xff] %v241
    %263 = vst [vmem:[#allocation2 + $0x10] sm:$0xff] %v245
    %264 = vst [vmem:[#allocation2 + $0x18] sm:$0xff] %v247
    %265 = vst [vmem:[#allocation2 + $0x20] sm:$0xff] %v251
    %266 = vst [vmem:[#allocation2 + $0x28] sm:$0xff] %v253
    %267 = vst [vmem:[#allocation2 + $0x30] sm:$0xff] %v257
    %268 = vst [vmem:[#allocation2 + $0x38] sm:$0xff] %v259
    %v269 = vld [vmem:[%s5] sm:$0xff]
    %v270 = vld [vmem:[%s5 + $0x8] sm:$0xff]
    %v271 = vld [vmem:[%s5 + $0x10] sm:$0xff]
    %v272 = vld [vmem:[%s5 + $0x18] sm:$0xff]
    %vm273 = vcmask 261120
    %v275 = vsel %vm273, %v269, 0
    %v278 = vsel %vm273, %v270, 0
    %v281 = vsel %vm273, %v271, 0
    %v284 = vsel %vm273, %v272, 0
    %286 = vmatprep.subr.mxu0 %v241
    %287 = vmatpush1.msra.mxu0 %v239
    %288 = vmatprep.subr.mxu0 %v247
    %289 = vmatpush1.msra.mxu0 %v245
    %290 = vmatprep.subr.mxu0 %v253
    %291 = vmatpush1.msra.mxu0 %v251
    %292 = vmatprep.subr.mxu0 %v259
    %293 = vmatpush1.msra.mxu0 %v257
    %294 = vmatprep.subr.mxu0 0.0
    %295 = vmatpush1.msra.mxu0 0.0
    %296 = vmatprep.subr.mxu0 0.0
    %297 = vmatpush1.msra.mxu0 0.0
    %298 = vmatprep.subr.mxu0 0.0
    %299 = vmatpush1.msra.mxu0 0.0
    %300 = vmatprep.subr.mxu0 0.0
    %301 = vmatpush1.msra.mxu0 0.0
    %302 = vmatprep.subr.mxu0 0.0
    %303 = vmatpush1.msra.mxu0 0.0
    %304 = vmatprep.subr.mxu0 0.0
    %305 = vmatpush1.msra.mxu0 0.0
    %306 = vmatprep.subr.mxu0 0.0
    %307 = vmatpush1.msra.mxu0 0.0
    %308 = vmatprep.subr.mxu0 0.0
    %309 = vmatpush1.msra.mxu0 0.0
    %310 = vmatprep.subr.mxu0 0.0
    %311 = vmatpush1.msra.mxu0 0.0
    %312 = vmatprep.subr.mxu0 0.0
    %313 = vmatpush1.msra.mxu0 0.0
    %314 = vmatprep.subr.mxu0 0.0
    %315 = vmatpush1.msra.mxu0 0.0
    %316 = vmatprep.subr.mxu0 0.0
    %317 = vmatpush1.msra.mxu0 0.0
    %318 = vmatprep.subr.mxu0 0.0
    %319 = vmatpush1.msra.mxu0 0.0
    %320 = vmatprep.subr.mxu0 0.0
    %321 = vmatpush1.msra.mxu0 0.0
    %322 = vmatprep.subr.mxu0 0.0
    %323 = vmatpush1.msra.mxu0 0.0
    %324 = vmatprep.subr.mxu0 0.0
    %325 = vmatpush1.msra.mxu0 0.0
    %326 = vmatprep.subr.mxu0 0.0
    %327 = vmatpush1.msra.mxu0 0.0
    %328 = vmatprep.subr.mxu0 0.0
    %329 = vmatpush1.msra.mxu0 0.0
    %330 = vmatprep.subr.mxu0 0.0
    %331 = vmatpush1.msra.mxu0 0.0
    %332 = vmatprep.subr.mxu0 0.0
    %333 = vmatpush1.msra.mxu0 0.0
    %334 = vmatprep.subr.mxu0 0.0
    %335 = vmatpush1.msra.mxu0 0.0
    %336 = vmatprep.subr.mxu0 0.0
    %337 = vmatpush1.msra.mxu0 0.0
    %338 = vmatprep.subr.mxu0 0.0
    %339 = vmatpush1.msra.mxu0 0.0
    %340 = vmatprep.subr.mxu0 0.0
    %341 = vmatpush1.msra.mxu0 0.0
    %342 = vmatprep.subr.mxu0 0.0
    %343 = vmatpush1.msra.mxu0 0.0
    %344 = vmatprep.subr.mxu0 0.0
    %345 = vmatpush1.msra.mxu0 0.0
    %346 = vmatprep.subr.mxu0 0.0
    %347 = vmatpush1.msra.mxu0 0.0
    %348 = vmatprep.subr.mxu0 0.0
    %349 = vmatpush1.msra.mxu0 0.0
    %350 = vmatprep.mubr.f32.mxu0 0.0
    %351 = vmatmul.mubr.f32.gmra.mrb[0].mxu0 %v275
    %v352 = vpop.f32.mrb[0].mxu0
    %v353 = vadd.f32 0.0, %v352
    %v354 = vpop.f32.mrb[0].mxu0
    %v355 = vadd.f32 0.0, %v354
    %356 = vmatprep.mubr.f32.mxu0 0.0
    %357 = vmatmul.mubr.f32.gmra.mrb[0].mxu0 %v278
    %v358 = vpop.f32.mrb[0].mxu0
    %v359 = vadd.f32 0.0, %v358
    %v360 = vpop.f32.mrb[0].mxu0
    %v361 = vadd.f32 0.0, %v360
    %362 = vmatprep.mubr.f32.mxu0 0.0
    %363 = vmatmul.mubr.f32.gmra.mrb[0].mxu0 %v281
    %v364 = vpop.f32.mrb[0].mxu0
    %v365 = vadd.f32 0.0, %v364
    %v366 = vpop.f32.mrb[0].mxu0
    %v367 = vadd.f32 0.0, %v366
    %368 = vmatprep.mubr.f32.mxu0 0.0
    %369 = vmatmul.mubr.f32.gmra.mrb[0].mxu0 %v284
    %v370 = vpop.f32.mrb[0].mxu0
    %v371 = vadd.f32 0.0, %v370
    %v372 = vpop.f32.mrb[0].mxu0
    %v373 = vadd.f32 0.0, %v372
    %374 = vdwg.mxu0
    %v375 = vpack.c.bf16 %v359, %v353
    %v376 = vpack.c.bf16 %v361, %v355
    %v377 = vpack.c.bf16 %v371, %v365
    %v378 = vpack.c.bf16 %v373, %v367
    %v383 = vunpack.c.l.b16 %v375
    %v384 = vunpack.c.l.b16 %v376
    %v385 = vunpack.c.h.b16 %v375
    %v386 = vunpack.c.h.b16 %v376
    %v387 = vunpack.c.l.b16 %v377
    %v388 = vunpack.c.l.b16 %v378
    %v389 = vunpack.c.h.b16 %v377
    %v390 = vunpack.c.h.b16 %v378
    %v391 = vpack.c.b16 %v384, %v383
    %v392 = vpack.c.b16 %v386, %v385
    %v393 = vpack.c.b16 %v388, %v387
    %v394 = vpack.c.b16 %v390, %v389
    %399 = vst [vmem:[#allocation4] sm:$0xff] %v391
    %400 = vst [vmem:[#allocation4 + $0x8] sm:$0xff] %v392
    %401 = vst [vmem:[#allocation4 + $0x10] sm:$0xff] %v393
    %402 = vst [vmem:[#allocation4 + $0x18] sm:$0xff] %v394
    // Predicated region
    $region26: #{tpu_custom_call.1} parent=1 // pred_check
      _
    $region27: #{tpu_custom_call.1} parent=1 // pred_check_branch
      %404 = sbr.rel (0) target = $region29
    $region28: #{tpu_custom_call.1} parent=1 // pred_region
      %s406 = ssub.s32 1024, 1024
      %407 = vsyncadd [#allocation3], %s406
      %s408 = sshll.u32 [#allocation2], 4
      %s409 = int_to_ptr.vmem [resolvable:$true] %s408
      %414 = dma.vmem_to_hbm [thread:$0]  %s409, 1024, %s6, [#allocation3], 256, 256, 16
    $region29: #{tpu_custom_call.1} parent=1 // pred_fallthru
      _
    // Predicated region
    $region30: #{tpu_custom_call.1} parent=1 // pred_check
      _
    $region31: #{tpu_custom_call.1} parent=1 // pred_check_branch
      %416 = sbr.rel (0) target = $region33
    $region32: #{tpu_custom_call.1} parent=1 // pred_region
      %s418 = ssub.s32 512, 512
      %419 = vsyncadd [#allocation5], %s418
      %s420 = sshll.u32 [#allocation4], 4
      %s421 = int_to_ptr.vmem [resolvable:$true] %s420
      %426 = dma.vmem_to_hbm [thread:$0]  %s421, 512, %s7, [#allocation5], 128, 128, 8
    $region33: #{tpu_custom_call.1} parent=1 // pred_fallthru
      _
    // Predicated region
    $region34: #{tpu_custom_call.1} parent=1 // pred_check
      _
    $region35: #{tpu_custom_call.1} parent=1 // pred_check_branch
      %428 = sbr.rel (0) target = $region37
    $region36: #{tpu_custom_call.1} parent=1 // pred_region
      %429 = dma.done [#allocation3], 1024
    $region37: #{tpu_custom_call.1} parent=1 // pred_fallthru
      _
    // Predicated region
    $region38: #{tpu_custom_call.1} parent=1 // pred_check
      _
    $region39: #{tpu_custom_call.1} parent=1 // pred_check_branch
      %431 = sbr.rel (0) target = $region41
    $region40: #{tpu_custom_call.1} parent=1 // pred_region
      %432 = dma.done [#allocation5], 512
    $region41: #{tpu_custom_call.1} parent=1 // pred_fallthru
      _
    %433 = vsyncpa [#allocation3], 1
    %434 = vsyncpa [#allocation5], 1

</llo_original>
